<compile_context>
chip_gen: v7x
topology: tpu7x:2x2x1
jax: 0.10.0
libtpu: 0.0.40
codegen_flags: <defaults>
</compile_context>

<pallas_src>
import functools
import math

import jax
import jax.numpy as jnp
from jax import lax
from jax.experimental import pallas as pl
from jax.experimental.pallas import tpu as pltpu

EPS = 1e-5  # nn.LayerNorm default


def _round_up(n, m):
    return ((n + m - 1) // m) * m


def _ffn_kernel(x_ref, gamma_ref, beta_ref, w1_ref, b1_ref, w2_ref, b2_ref,
                o_ref, xn_ref, acc_ref, *, d_actual):
    # Grid: (row tiles, hidden-dim chunks).  The x / output block index is
    # constant along axis 1, so x is fetched once per row tile and the output
    # is written back once, at the last hidden chunk.
    k = pl.program_id(1)
    k_last = pl.num_programs(1) - 1

    @pl.when(k == 0)
    def _():
        # ---- LayerNorm over the real feature dim (padded lanes hold zeros) ---
        x = x_ref[...].astype(jnp.float32)
        inv_d = jnp.float32(1.0 / d_actual)
        mean = jnp.sum(x, axis=-1, keepdims=True) * inv_d
        # One-pass (E[x^2] - mean^2) variance: padded lanes are zero so both
        # sums only cover the real D features; clamp for numerical safety.
        var = jnp.maximum(
            jnp.sum(x * x, axis=-1, keepdims=True) * inv_d - mean * mean, 0.0)
        xn = (x - mean) * lax.rsqrt(var + EPS)
        xn = xn * gamma_ref[...].astype(jnp.float32) \
             + beta_ref[...].astype(jnp.float32)
        # Cache in bf16 for the MXU; padded lanes stay zero (gamma/beta are
        # zero-padded and W1's padded rows are zero anyway).
        xn_ref[...] = xn.astype(xn_ref.dtype)

    # ---- Linear(dim -> hidden chunk) + exact GELU (PyTorch nn.GELU default) --
    h = jnp.dot(xn_ref[...], w1_ref[...], preferred_element_type=jnp.float32)
    h = h + b1_ref[...].astype(jnp.float32)
    h = 0.5 * h * (1.0 + lax.erf(h * jnp.float32(1.0 / math.sqrt(2.0))))
    # TODO(synk): training-mode dropout (stochastic mask) not implemented;
    # eval-mode dropout is identity.

    # ---- Linear(hidden chunk -> dim), accumulated over hidden chunks ---------
    partial = jnp.dot(h.astype(jnp.bfloat16), w2_ref[...],
                      preferred_element_type=jnp.float32)

    @pl.when(k == 0)
    def _():
        acc_ref[...] = partial            # first chunk: write, no zero-fill

    @pl.when(k != 0)
    def _():
        acc_ref[...] = acc_ref[...] + partial

    @pl.when(k == k_last)
    def _():
        y = acc_ref[...] + b2_ref[...].astype(jnp.float32)
        o_ref[...] = (x_ref[...].astype(jnp.float32) + y).astype(o_ref.dtype)


@functools.partial(jax.jit, static_argnames=("tile_m", "tile_h"))
def feed_forward_block(x, gamma, beta, w1, b1, w2, b2, *,
                       tile_m=256, tile_h=512):
    """x: (B, S, D) float32.  Returns x + FFN(LayerNorm(x)) with same shape."""
    B, S, D = x.shape
    H = w1.shape[1]
    M = B * S

    # --- tile / padding selection (lane-dense, MXU-friendly) ---
    tile_m = max(8, min(tile_m, _round_up(M, 8)))
    assert tile_m % 8 == 0
    D_pad = _round_up(D, 128)
    H_pad = _round_up(H, 128)
    tile_h = max(128, min(tile_h, H_pad))
    assert tile_h % 128 == 0
    H_pad = _round_up(H_pad, tile_h)
    M_pad = _round_up(M, tile_m)

    # --- pad operands (zeros in padded regions keep the math exact) ---
    x2 = jnp.pad(x.reshape(M, D), ((0, M_pad - M), (0, D_pad - D)))
    gamma2 = jnp.pad(gamma.astype(jnp.float32), (0, D_pad - D)).reshape(1, D_pad)
    beta2 = jnp.pad(beta.astype(jnp.float32), (0, D_pad - D)).reshape(1, D_pad)
    w1p = jnp.pad(w1.astype(jnp.bfloat16), ((0, D_pad - D), (0, H_pad - H)))
    b1p = jnp.pad(b1.astype(jnp.float32), (0, H_pad - H)).reshape(1, H_pad)
    w2p = jnp.pad(w2.astype(jnp.bfloat16), ((0, H_pad - H), (0, D_pad - D)))
    b2p = jnp.pad(b2.astype(jnp.float32), (0, D_pad - D)).reshape(1, D_pad)

    grid = (M_pad // tile_m, H_pad // tile_h)

    # --- explicit VMEM budget: double-buffered blocks + scratch + headroom ---
    f32b, bf16b = 4, 2
    vmem_bytes = (
        2 * tile_m * D_pad * f32b                  # x tile (double buffered)
        + 2 * tile_m * D_pad * x.dtype.itemsize    # out tile
        + 2 * D_pad * tile_h * bf16b               # W1 chunk
        + 2 * tile_h * D_pad * bf16b               # W2 chunk
        + 2 * (3 * D_pad + tile_h) * f32b          # gamma/beta/b2/b1
        + tile_m * D_pad * (bf16b + f32b)          # xn cache + f32 accumulator
    )
    vmem_bytes = int(min(vmem_bytes * 1.5 + (4 << 20), 64 << 20))

    kernel = functools.partial(_ffn_kernel, d_actual=D)

    out = pl.pallas_call(
        kernel,
        out_shape=jax.ShapeDtypeStruct((M_pad, D_pad), x.dtype),
        grid_spec=pltpu.PrefetchScalarGridSpec(
            num_scalar_prefetch=0,
            grid=grid,
            in_specs=[
                pl.BlockSpec((tile_m, D_pad), lambda i, k: (i, 0)),   # x tile
                pl.BlockSpec((1, D_pad), lambda i, k: (0, 0)),        # gamma
                pl.BlockSpec((1, D_pad), lambda i, k: (0, 0)),        # beta
                pl.BlockSpec((D_pad, tile_h), lambda i, k: (0, k)),   # W1 chunk
                pl.BlockSpec((1, tile_h), lambda i, k: (0, k)),       # b1 chunk
                pl.BlockSpec((tile_h, D_pad), lambda i, k: (k, 0)),   # W2 chunk
                pl.BlockSpec((1, D_pad), lambda i, k: (0, 0)),        # b2
            ],
            out_specs=pl.BlockSpec((tile_m, D_pad), lambda i, k: (i, 0)),
            scratch_shapes=[
                pltpu.VMEM((tile_m, D_pad), jnp.bfloat16),  # cached LayerNorm
                pltpu.VMEM((tile_m, D_pad), jnp.float32),   # y accumulator
            ],
        ),
        compiler_params=pltpu.CompilerParams(
            dimension_semantics=("parallel", "arbitrary"),
            vmem_limit_bytes=vmem_bytes),
    )(x2, gamma2, beta2, w1p, b1p, w2p, b2p)

    return out[:M, :D].reshape(B, S, D)


def init_params(key, dim, hidden_dim):
    """Deterministic parameter init mimicking nn.Linear / nn.LayerNorm shapes."""
    k1, k2, k3, k4 = jax.random.split(key, 4)
    gamma = jnp.ones((dim,), jnp.float32)
    beta = jnp.zeros((dim,), jnp.float32)
    lim1 = 1.0 / math.sqrt(dim)
    w1 = jax.random.uniform(k1, (dim, hidden_dim), jnp.float32, -lim1, lim1)
    b1 = jax.random.uniform(k2, (hidden_dim,), jnp.float32, -lim1, lim1)
    lim2 = 1.0 / math.sqrt(hidden_dim)
    w2 = jax.random.uniform(k3, (hidden_dim, dim), jnp.float32, -lim2, lim2)
    b2 = jax.random.uniform(k4, (dim,), jnp.float32, -lim2, lim2)
    return gamma, beta, w1, b1, w2, b2


def _reference(x, gamma, beta, w1, b1, w2, b2):
    """Pure-JAX f32 reference (eval-mode FeedForwardBlock.forward)."""
    mean = jnp.mean(x, axis=-1, keepdims=True)
    var = jnp.mean((x - mean) ** 2, axis=-1, keepdims=True)
    xn = (x - mean) / jnp.sqrt(var + EPS) * gamma + beta
    h = xn @ w1 + b1
    h = 0.5 * h * (1.0 + lax.erf(h / math.sqrt(2.0)))
    y = h @ w2 + b2
    return x + y


if __name__ == "__main__":
    B, S, D = 2, 8, 32           # batch, seq, dim
    H = D * 4                    # hidden_dim = dim * 4 (module default)

    key = jax.random.PRNGKey(0)
    kx, kp = jax.random.split(key)
    x = jax.random.normal(kx, (B, S, D), jnp.float32)
    gamma, beta, w1, b1, w2, b2 = init_params(kp, D, H)

    out = feed_forward_block(x, gamma, beta, w1, b1, w2, b2)
    out = jax.block_until_ready(out)

    ref = _reference(x, gamma, beta, w1, b1, w2, b2)
    assert out.shape == x.shape and out.dtype == x.dtype
    # Tolerance accounts for bf16 MXU operands (f32 accumulation); LayerNorm,
    # GELU, bias and residual are computed in f32.
    max_err = float(jnp.max(jnp.abs(out - ref)))
    assert jnp.allclose(out, ref, atol=5e-2, rtol=5e-2), \
        f"mismatch vs reference (max abs err {max_err})"

    print("KERNEL_OK")
</pallas_src>

<mosaic_0001>
module attributes {stable_mosaic.version = 11 : i64} {
  func.func @_ffn_kernel(%arg0: i32, %arg1: i32, %arg2: memref<16x128xf32, #tpu.memory_space<vmem>>, %arg3: memref<1x128xf32, #tpu.memory_space<vmem>>, %arg4: memref<1x128xf32, #tpu.memory_space<vmem>>, %arg5: memref<128x128xbf16, #tpu.memory_space<vmem>>, %arg6: memref<1x128xf32, #tpu.memory_space<vmem>>, %arg7: memref<128x128xbf16, #tpu.memory_space<vmem>>, %arg8: memref<1x128xf32, #tpu.memory_space<vmem>>, %arg9: memref<16x128xf32, #tpu.memory_space<vmem>>, %arg10: memref<16x128xbf16, #tpu.memory_space<vmem>>, %arg11: memref<16x128xf32, #tpu.memory_space<vmem>>) attributes {dimension_semantics = [#tpu.dimension_semantics<parallel>, #tpu.dimension_semantics<arbitrary>], iteration_bounds = array<i64: 1, 1>, scalar_prefetch = 0 : i64, scratch_operands = 2 : i64, tpu.core_type = #tpu.core_type<tc>, window_params = [{transform_indices = @transform_0, window_bounds = array<i64: 16, 128>}, {pipeline_mode = #tpu.pipeline_mode<synchronous>, transform_indices = @transform_1, window_bounds = array<i64: 1, 128>}, {pipeline_mode = #tpu.pipeline_mode<synchronous>, transform_indices = @transform_2, window_bounds = array<i64: 1, 128>}, {transform_indices = @transform_3, window_bounds = array<i64: 128, 128>}, {transform_indices = @transform_4, window_bounds = array<i64: 1, 128>}, {transform_indices = @transform_5, window_bounds = array<i64: 128, 128>}, {pipeline_mode = #tpu.pipeline_mode<synchronous>, transform_indices = @transform_6, window_bounds = array<i64: 1, 128>}, {transform_indices = @transform_7, window_bounds = array<i64: 16, 128>}]} {
    %c0_i32 = arith.constant 0 : i32
    %0 = arith.cmpi eq, %arg1, %c0_i32 : i32
    %1 = arith.extui %0 : i1 to i32
    %c0_i32_0 = arith.constant 0 : i32
    %2 = arith.cmpi ne, %1, %c0_i32_0 : i32
    scf.if %2 {
      %c0_18 = arith.constant 0 : index
      %c0_19 = arith.constant 0 : index
      %29 = vector.load %arg2[%c0_18, %c0_19] : memref<16x128xf32, #tpu.memory_space<vmem>>, vector<16x128xf32>
      %cst_20 = arith.constant dense<0.000000e+00> : vector<16xf32>
      %30 = vector.multi_reduction <add>, %29, %cst_20 [1] : vector<16x128xf32> to vector<16xf32>
      %31 = vector.shape_cast %30 : vector<16xf32> to vector<16x1xf32>
      %cst_21 = arith.constant 3.125000e-02 : f32
      %32 = vector.broadcast %cst_21 : f32 to vector<16x1xf32>
      %33 = arith.mulf %31, %32 : vector<16x1xf32>
      %34 = arith.mulf %29, %29 : vector<16x128xf32>
      %cst_22 = arith.constant dense<0.000000e+00> : vector<16xf32>
      %35 = vector.multi_reduction <add>, %34, %cst_22 [1] : vector<16x128xf32> to vector<16xf32>
      %36 = vector.shape_cast %35 : vector<16xf32> to vector<16x1xf32>
      %cst_23 = arith.constant 3.125000e-02 : f32
      %37 = vector.broadcast %cst_23 : f32 to vector<16x1xf32>
      %38 = arith.mulf %36, %37 : vector<16x1xf32>
      %39 = arith.mulf %33, %33 : vector<16x1xf32>
      %40 = arith.subf %38, %39 : vector<16x1xf32>
      %cst_24 = arith.constant 0.000000e+00 : f32
      %41 = vector.broadcast %cst_24 : f32 to vector<16x1xf32>
      %42 = arith.maximumf %40, %41 : vector<16x1xf32>
      %43 = vector.broadcast %33 : vector<16x1xf32> to vector<16x128xf32>
      %44 = arith.subf %29, %43 : vector<16x128xf32>
      %cst_25 = arith.constant 9.99999974E-6 : f32
      %45 = vector.broadcast %cst_25 : f32 to vector<16x1xf32>
      %46 = arith.addf %42, %45 : vector<16x1xf32>
      %47 = math.rsqrt %46 : vector<16x1xf32>
      %48 = vector.broadcast %47 : vector<16x1xf32> to vector<16x128xf32>
      %49 = arith.mulf %44, %48 : vector<16x128xf32>
      %c0_26 = arith.constant 0 : index
      %c0_27 = arith.constant 0 : index
      %50 = vector.load %arg3[%c0_26, %c0_27] : memref<1x128xf32, #tpu.memory_space<vmem>>, vector<1x128xf32>
      %51 = vector.broadcast %50 : vector<1x128xf32> to vector<16x128xf32>
      %52 = arith.mulf %49, %51 : vector<16x128xf32>
      %c0_28 = arith.constant 0 : index
      %c0_29 = arith.constant 0 : index
      %53 = vector.load %arg4[%c0_28, %c0_29] : memref<1x128xf32, #tpu.memory_space<vmem>>, vector<1x128xf32>
      %54 = vector.broadcast %53 : vector<1x128xf32> to vector<16x128xf32>
      %55 = arith.addf %52, %54 : vector<16x128xf32>
      %56 = arith.truncf %55 : vector<16x128xf32> to vector<16x128xbf16>
      %c0_30 = arith.constant 0 : index
      %c0_31 = arith.constant 0 : index
      %57 = vector.load %arg10[%c0_30, %c0_31] : memref<16x128xbf16, #tpu.memory_space<vmem>>, vector<16x128xbf16>
      tpu.vector_store %arg10[%c0_30, %c0_31], %56 {strides = array<i32>} : memref<16x128xbf16, #tpu.memory_space<vmem>>, vector<16x128xbf16>,
    } else {
    }
    %c0 = arith.constant 0 : index
    %c0_1 = arith.constant 0 : index
    %3 = vector.load %arg10[%c0, %c0_1] : memref<16x128xbf16, #tpu.memory_space<vmem>>, vector<16x128xbf16>
    %c0_2 = arith.constant 0 : index
    %c0_3 = arith.constant 0 : index
    %4 = vector.load %arg5[%c0_2, %c0_3] : memref<128x128xbf16, #tpu.memory_space<vmem>>, vector<128x128xbf16>
    %cst = arith.constant dense<0.000000e+00> : vector<16x128xf32>
    %5 = tpu.matmul %3, %4, %cst {dimension_numbers = #tpu.dot_dimension_numbers<[1], [0], [0], [1], [0, 0, 1, 1], [], []>} : vector<16x128xbf16>, vector<128x128xbf16>, vector<16x128xf32> -> vector<16x128xf32>
    %c0_4 = arith.constant 0 : index
    %c0_5 = arith.constant 0 : index
    %6 = vector.load %arg6[%c0_4, %c0_5] : memref<1x128xf32, #tpu.memory_space<vmem>>, vector<1x128xf32>
    %7 = vector.broadcast %6 : vector<1x128xf32> to vector<16x128xf32>
    %8 = arith.addf %5, %7 : vector<16x128xf32>
    %cst_6 = arith.constant 5.000000e-01 : f32
    %9 = vector.broadcast %cst_6 : f32 to vector<16x128xf32>
    %10 = arith.mulf %9, %8 : vector<16x128xf32>
    %cst_7 = arith.constant 0.707106769 : f32
    %11 = vector.broadcast %cst_7 : f32 to vector<16x128xf32>
    %12 = arith.mulf %8, %11 : vector<16x128xf32>
    %13 = math.erf %12 : vector<16x128xf32>
    %cst_8 = arith.constant 1.000000e+00 : f32
    %14 = vector.broadcast %cst_8 : f32 to vector<16x128xf32>
    %15 = arith.addf %14, %13 : vector<16x128xf32>
    %16 = arith.mulf %10, %15 : vector<16x128xf32>
    %17 = arith.truncf %16 : vector<16x128xf32> to vector<16x128xbf16>
    %c0_9 = arith.constant 0 : index
    %c0_10 = arith.constant 0 : index
    %18 = vector.load %arg7[%c0_9, %c0_10] : memref<128x128xbf16, #tpu.memory_space<vmem>>, vector<128x128xbf16>
    %cst_11 = arith.constant dense<0.000000e+00> : vector<16x128xf32>
    %19 = tpu.matmul %17, %18, %cst_11 {dimension_numbers = #tpu.dot_dimension_numbers<[1], [0], [0], [1], [0, 0, 1, 1], [], []>} : vector<16x128xbf16>, vector<128x128xbf16>, vector<16x128xf32> -> vector<16x128xf32>
    %c0_i32_12 = arith.constant 0 : i32
    %20 = arith.cmpi eq, %arg1, %c0_i32_12 : i32
    %21 = arith.extui %20 : i1 to i32
    %c0_i32_13 = arith.constant 0 : i32
    %22 = arith.cmpi ne, %21, %c0_i32_13 : i32
    scf.if %22 {
      %c0_18 = arith.constant 0 : index
      %c0_19 = arith.constant 0 : index
      %29 = vector.load %arg11[%c0_18, %c0_19] : memref<16x128xf32, #tpu.memory_space<vmem>>, vector<16x128xf32>
      tpu.vector_store %arg11[%c0_18, %c0_19], %19 {strides = array<i32>} : memref<16x128xf32, #tpu.memory_space<vmem>>, vector<16x128xf32>,
    } else {
    }
    %c0_i32_14 = arith.constant 0 : i32
    %23 = arith.cmpi ne, %arg1, %c0_i32_14 : i32
    %24 = arith.extui %23 : i1 to i32
    %c0_i32_15 = arith.constant 0 : i32
    %25 = arith.cmpi ne, %24, %c0_i32_15 : i32
    scf.if %25 {
      %c0_18 = arith.constant 0 : index
      %c0_19 = arith.constant 0 : index
      %29 = vector.load %arg11[%c0_18, %c0_19] : memref<16x128xf32, #tpu.memory_space<vmem>>, vector<16x128xf32>
      %30 = arith.addf %29, %19 : vector<16x128xf32>
      %c0_20 = arith.constant 0 : index
      %c0_21 = arith.constant 0 : index
      %31 = vector.load %arg11[%c0_20, %c0_21] : memref<16x128xf32, #tpu.memory_space<vmem>>, vector<16x128xf32>
      tpu.vector_store %arg11[%c0_20, %c0_21], %30 {strides = array<i32>} : memref<16x128xf32, #tpu.memory_space<vmem>>, vector<16x128xf32>,
    } else {
    }
    %c0_i32_16 = arith.constant 0 : i32
    %26 = arith.cmpi eq, %arg1, %c0_i32_16 : i32
    %27 = arith.extui %26 : i1 to i32
    %c0_i32_17 = arith.constant 0 : i32
    %28 = arith.cmpi ne, %27, %c0_i32_17 : i32
    scf.if %28 {
      %c0_18 = arith.constant 0 : index
      %c0_19 = arith.constant 0 : index
      %29 = vector.load %arg11[%c0_18, %c0_19] : memref<16x128xf32, #tpu.memory_space<vmem>>, vector<16x128xf32>
      %c0_20 = arith.constant 0 : index
      %c0_21 = arith.constant 0 : index
      %30 = vector.load %arg8[%c0_20, %c0_21] : memref<1x128xf32, #tpu.memory_space<vmem>>, vector<1x128xf32>
      %31 = vector.broadcast %30 : vector<1x128xf32> to vector<16x128xf32>
      %32 = arith.addf %29, %31 : vector<16x128xf32>
      %c0_22 = arith.constant 0 : index
      %c0_23 = arith.constant 0 : index
      %33 = vector.load %arg2[%c0_22, %c0_23] : memref<16x128xf32, #tpu.memory_space<vmem>>, vector<16x128xf32>
      %34 = arith.addf %33, %32 : vector<16x128xf32>
      %c0_24 = arith.constant 0 : index
      %c0_25 = arith.constant 0 : index
      %35 = vector.load %arg9[%c0_24, %c0_25] : memref<16x128xf32, #tpu.memory_space<vmem>>, vector<16x128xf32>
      tpu.vector_store %arg9[%c0_24, %c0_25], %34 {strides = array<i32>} : memref<16x128xf32, #tpu.memory_space<vmem>>, vector<16x128xf32>,
    } else {
    }
    return
  }
  func.func @transform_0(%arg0: i32, %arg1: i32) -> (i32, i32) {
    %c0_i32 = arith.constant 0 : i32
    %c0_i32_0 = arith.constant 0 : i32
    return %arg0, %c0_i32 : i32, i32
  }
  func.func @transform_1(%arg0: i32, %arg1: i32) -> (i32, i32) {
    %c0_i32 = arith.constant 0 : i32
    %c0_i32_0 = arith.constant 0 : i32
    %c0_i32_1 = arith.constant 0 : i32
    return %c0_i32, %c0_i32_0 : i32, i32
  }
  func.func @transform_2(%arg0: i32, %arg1: i32) -> (i32, i32) {
    %c0_i32 = arith.constant 0 : i32
    %c0_i32_0 = arith.constant 0 : i32
    %c0_i32_1 = arith.constant 0 : i32
    return %c0_i32, %c0_i32_0 : i32, i32
  }
  func.func @transform_3(%arg0: i32, %arg1: i32) -> (i32, i32) {
    %c0_i32 = arith.constant 0 : i32
    %c0_i32_0 = arith.constant 0 : i32
    return %c0_i32, %arg1 : i32, i32
  }
  func.func @transform_4(%arg0: i32, %arg1: i32) -> (i32, i32) {
    %c0_i32 = arith.constant 0 : i32
    %c0_i32_0 = arith.constant 0 : i32
    return %c0_i32, %arg1 : i32, i32
  }
  func.func @transform_5(%arg0: i32, %arg1: i32) -> (i32, i32) {
    %c0_i32 = arith.constant 0 : i32
    %c0_i32_0 = arith.constant 0 : i32
    return %arg1, %c0_i32 : i32, i32
  }
  func.func @transform_6(%arg0: i32, %arg1: i32) -> (i32, i32) {
    %c0_i32 = arith.constant 0 : i32
    %c0_i32_0 = arith.constant 0 : i32
    %c0_i32_1 = arith.constant 0 : i32
    return %c0_i32, %c0_i32_0 : i32, i32
  }
  func.func @transform_7(%arg0: i32, %arg1: i32) -> (i32, i32) {
    %c0_i32 = arith.constant 0 : i32
    %c0_i32_0 = arith.constant 0 : i32
    return %arg0, %c0_i32 : i32, i32
  }
}

</mosaic_0001>

<llo_original>
// kernel: feed_forward_block.1
$region0: #{feed_forward_block.1}
  #allocation0 [shape = 'u32[]', space=smem, size = 0x4, offset = 0x4, fixed_abs, tag = 'smem constant byte address 0x4 - core index']
  #allocation1 [shape = 'u32[144,128]{1,0:T(1,128)}', space=vmem, size = 0x12000, scoped, tag = 'internal scratch']
  #allocation2 [shape = 'bf16[16,128]{1,0:T(16,128)(2,1)}', space=vmem, size = 0x1000, scoped, tag = 'scratch operand']
  #allocation3 [shape = 'f32[16,128]{1,0:T(8,128)}', space=vmem, size = 0x2000, scoped, tag = 'scratch operand']
  %s0 = inlined_call_operand.vmem [shape: f32[16,128], index: 0, kind: input, shape index: {}]
  %s1 = inlined_call_operand.vmem [shape: f32[1,128], index: 1, kind: input, shape index: {}]
  %s2 = inlined_call_operand.vmem [shape: f32[1,128], index: 2, kind: input, shape index: {}]
  %s3 = inlined_call_operand.vmem [shape: bf16[128,128], index: 3, kind: input, shape index: {}]
  %s4 = inlined_call_operand.vmem [shape: f32[1,128], index: 4, kind: input, shape index: {}]
  %s5 = inlined_call_operand.vmem [shape: bf16[128,128], index: 5, kind: input, shape index: {}]
  %s6 = inlined_call_operand.vmem [shape: f32[1,128], index: 6, kind: input, shape index: {}]
  %s7 = inlined_call_operand.vmem [shape: f32[16,128], index: 7, kind: output, shape index: {}]
  %s8 = sld [smem:[#allocation0]]
  $region54: #{feed_forward_block.1} parent=0
    _
  %s10 = ssub.s32 1, %s8
  %s11 = scalar_select 0, %s10, %s8
  // Predicated region
  $region2: #{feed_forward_block.1} parent=0 // pred_check
    _
  $region3: #{feed_forward_block.1} parent=0 // pred_check_branch
    %13 = sbr.rel (0) target = $region5
  $region4: #{feed_forward_block.1} parent=0 // pred_region
    _
  $region5: #{feed_forward_block.1} parent=0 // pred_fallthru
    _
  // Predicated region
  $region6: #{feed_forward_block.1} parent=0 // pred_check
    _
  $region7: #{feed_forward_block.1} parent=0 // pred_check_branch
    %15 = sbr.rel (0) target = $region9
  $region8: #{feed_forward_block.1} parent=0 // pred_region
    _
  $region9: #{feed_forward_block.1} parent=0 // pred_fallthru
    _
  // Predicated region
  $region10: #{feed_forward_block.1} parent=0 // pred_check
    _
  $region11: #{feed_forward_block.1} parent=0 // pred_check_branch
    %17 = sbr.rel (0) target = $region13
  $region12: #{feed_forward_block.1} parent=0 // pred_region
    _
  $region13: #{feed_forward_block.1} parent=0 // pred_fallthru
    _
  // Predicated region
  $region14: #{feed_forward_block.1} parent=0 // pred_check
    _
  $region15: #{feed_forward_block.1} parent=0 // pred_check_branch
    %19 = sbr.rel (0) target = $region17
  $region16: #{feed_forward_block.1} parent=0 // pred_region
    _
  $region17: #{feed_forward_block.1} parent=0 // pred_fallthru
    _
  // Predicated region
  $region18: #{feed_forward_block.1} parent=0 // pred_check
    _
  $region19: #{feed_forward_block.1} parent=0 // pred_check_branch
    %21 = sbr.rel (0) target = $region21
  $region20: #{feed_forward_block.1} parent=0 // pred_region
    _
  $region21: #{feed_forward_block.1} parent=0 // pred_fallthru
    _
  // Predicated region
  $region22: #{feed_forward_block.1} parent=0 // pred_check
    _
  $region23: #{feed_forward_block.1} parent=0 // pred_check_branch
    %23 = sbr.rel (0) target = $region25
  $region24: #{feed_forward_block.1} parent=0 // pred_region
    _
  $region25: #{feed_forward_block.1} parent=0 // pred_fallthru
    _
  // Predicated region
  $region26: #{feed_forward_block.1} parent=0 // pred_check
    _
  $region27: #{feed_forward_block.1} parent=0 // pred_check_branch
    %25 = sbr.rel (0) target = $region29
  $region28: #{feed_forward_block.1} parent=0 // pred_region
    _
  $region29: #{feed_forward_block.1} parent=0 // pred_fallthru
    _
  %p27 = scmp.eq.s32.totalorder 0, 0
  // Predicated region
  $region30: #{feed_forward_block.1} parent=0 // pred_check
    %p28 = pneg %p27
  $region31: #{feed_forward_block.1} parent=0 // pred_check_branch
    %30 = sbr.rel (%p28) target = $region33
  $region32: #{feed_forward_block.1} parent=0 // pred_region
    %v31 = vld [vmem:[%s0] sm:$0xff]
    %v32 = vld [vmem:[%s0 + $0x8] sm:$0xff]
    %33 = vadd.xlane.f32.xlu0 %v31
    %v34 = vpop.xlane.xlu0 %33
    %35 = vadd.xlane.f32.xlu0 %v32
    %v36 = vpop.xlane.xlu0 %35
    %v37 = vmul.f32 %v34, 0.03125
    %v38 = vmul.f32 %v36, 0.03125
    %v39 = vmul.f32 %v31, %v31
    %v40 = vmul.f32 %v32, %v32
    %41 = vadd.xlane.f32.xlu0 %v39
    %v42 = vpop.xlane.xlu0 %41
    %43 = vadd.xlane.f32.xlu0 %v40
    %v44 = vpop.xlane.xlu0 %43
    %v45 = vmul.f32 %v42, 0.03125
    %v46 = vmul.f32 %v44, 0.03125
    %v47 = vmul.f32 %v37, %v37
    %v48 = vmul.f32 %v38, %v38
    %v49 = vsub.f32 %v45, %v47
    %v50 = vsub.f32 %v46, %v48
    %v51 = vmax.f32 %v49, 0.0
    %v52 = vmax.f32 %v50, 0.0
    %v53 = vsub.f32 %v31, %v37
    %v54 = vsub.f32 %v32, %v38
    %v55 = vadd.f32 %v51, 1e-05
    %v56 = vadd.f32 %v52, 1e-05
    %v57 = vrsqrt.pop %v55
    %v58 = vrsqrt.pop %v56
    %v59 = vmul.f32 %v53, %v57
    %v60 = vmul.f32 %v54, %v58
    %v61 = vld [vmem:[%s1] sm:$0x1]
    %v63 = vlaneseq
    %v64 = vshrl.u32 %v63, 7
    %v65 = vsub.s32 0, %v64
    %v66 = vrot.slane %v61, %v65
    %v68 = vmul.f32 %v59, %v66
    %v69 = vmul.f32 %v60, %v66
    %v70 = vld [vmem:[%s2] sm:$0x1]
    %v72 = vlaneseq
    %v73 = vshrl.u32 %v72, 7
    %v74 = vsub.s32 0, %v73
    %v75 = vrot.slane %v70, %v74
    %v77 = vadd.f32 %v68, %v75
    %v78 = vadd.f32 %v69, %v75
    %v79 = vpack.c.bf16 %v78, %v77
    %80 = vst [vmem:[#allocation2] sm:$0xff] %v79
  $region33: #{feed_forward_block.1} parent=0 // pred_fallthru
    _
  %v81 = vld [vmem:[#allocation2] sm:$0xff]
  %v82 = vld [vmem:[%s3] sm:$0xf]
  %v83 = vld [vmem:[%s3 + $0x4] sm:$0xf]
  %v84 = vld [vmem:[%s3 + $0x8] sm:$0xf]
  %v85 = vld [vmem:[%s3 + $0xc] sm:$0xf]
  %v86 = vld [vmem:[%s3 + $0x10] sm:$0xf]
  %v87 = vld [vmem:[%s3 + $0x14] sm:$0xf]
  %v88 = vld [vmem:[%s3 + $0x18] sm:$0xf]
  %v89 = vld [vmem:[%s3 + $0x1c] sm:$0xf]
  %v90 = vld [vmem:[%s3 + $0x20] sm:$0xf]
  %v91 = vld [vmem:[%s3 + $0x24] sm:$0xf]
  %v92 = vld [vmem:[%s3 + $0x28] sm:$0xf]
  %v93 = vld [vmem:[%s3 + $0x2c] sm:$0xf]
  %v94 = vld [vmem:[%s3 + $0x30] sm:$0xf]
  %v95 = vld [vmem:[%s3 + $0x34] sm:$0xf]
  %v96 = vld [vmem:[%s3 + $0x38] sm:$0xf]
  %v97 = vld [vmem:[%s3 + $0x3c] sm:$0xf]
  %v98 = vld [vmem:[%s4] sm:$0x1]
  %v100 = vlaneseq
  %v101 = vshrl.u32 %v100, 7
  %v102 = vsub.s32 0, %v101
  %v103 = vrot.slane %v98, %v102
  %v121 = vunpack.c.l.b16 %v82
  %v122 = vunpack.c.l.b16 %v83
  %v123 = vunpack.c.l.b16 %v84
  %v124 = vunpack.c.l.b16 %v85
  %v125 = vunpack.c.l.b16 %v86
  %v126 = vunpack.c.l.b16 %v87
  %v127 = vunpack.c.l.b16 %v88
  %v128 = vunpack.c.l.b16 %v89
  %v129 = vunpack.c.l.b16 %v90
  %v130 = vunpack.c.l.b16 %v91
  %v131 = vunpack.c.l.b16 %v92
  %v132 = vunpack.c.l.b16 %v93
  %v133 = vunpack.c.l.b16 %v94
  %v134 = vunpack.c.l.b16 %v95
  %v135 = vunpack.c.l.b16 %v96
  %v136 = vunpack.c.l.b16 %v97
  %v137 = vpack.c.b16 %v122, %v121
  %v138 = vpack.c.b16 %v124, %v123
  %v139 = vpack.c.b16 %v126, %v125
  %v140 = vpack.c.b16 %v128, %v127
  %v141 = vpack.c.b16 %v130, %v129
  %v142 = vpack.c.b16 %v132, %v131
  %v143 = vpack.c.b16 %v134, %v133
  %v144 = vpack.c.b16 %v136, %v135
  %153 = vmatprep.subr.bf16.mxu0 0
  %154 = vmatpush1.bf16.msra.mxu0 %v137
  %155 = vmatprep.subr.bf16.mxu0 0
  %156 = vmatpush1.bf16.msra.mxu0 %v138
  %157 = vmatprep.subr.bf16.mxu0 0
  %158 = vmatpush1.bf16.msra.mxu0 %v139
  %159 = vmatprep.subr.bf16.mxu0 0
  %160 = vmatpush1.bf16.msra.mxu0 %v140
  %161 = vmatprep.subr.bf16.mxu0 0
  %162 = vmatpush1.bf16.msra.mxu0 %v141
  %163 = vmatprep.subr.bf16.mxu0 0
  %164 = vmatpush1.bf16.msra.mxu0 %v142
  %165 = vmatprep.subr.bf16.mxu0 0
  %166 = vmatpush1.bf16.msra.mxu0 %v143
  %167 = vmatprep.subr.bf16.mxu0 0
  %168 = vmatpush1.bf16.msra.mxu0 %v144
  %169 = vmatprep.subr.bf16.mxu0 0
  %170 = vmatpush1.bf16.msra.mxu0 0
  %171 = vmatprep.subr.bf16.mxu0 0
  %172 = vmatpush1.bf16.msra.mxu0 0
  %173 = vmatprep.subr.bf16.mxu0 0
  %174 = vmatpush1.bf16.msra.mxu0 0
  %175 = vmatprep.subr.bf16.mxu0 0
  %176 = vmatpush1.bf16.msra.mxu0 0
  %177 = vmatprep.subr.bf16.mxu0 0
  %178 = vmatpush1.bf16.msra.mxu0 0
  %179 = vmatprep.subr.bf16.mxu0 0
  %180 = vmatpush1.bf16.msra.mxu0 0
  %181 = vmatprep.subr.bf16.mxu0 0
  %182 = vmatpush1.bf16.msra.mxu0 0
  %183 = vmatprep.subr.bf16.mxu0 0
  %184 = vmatpush1.bf16.msra.mxu0 0
  %185 = vmatprep.mubr.bf16.mxu0 0
  %186 = vmatmul.mubr.bf16.gmra.mrb[0].mxu0 %v81
  %v187 = vpop.f32.mrb[0].mxu0
  %v188 = vadd.f32 %v103, %v187
  %v189 = vpop.f32.mrb[0].mxu0
  %v190 = vpop.f32.mrb[0].mxu0
  %v191 = vadd.f32 %v103, %v190
  %v192 = vpop.f32.mrb[0].mxu0
  %193 = vdwg.mxu0
  %v194 = vmul.f32 %v188, 0.5
  %v195 = vmul.f32 %v191, 0.5
  %v196 = vmul.f32 %v188, 0.70710677
  %v197 = vmul.f32 %v191, 0.70710677
  %v198 = verf.f32.pop %v196
  %v199 = verf.f32.pop %v197
  %v200 = vadd.f32 %v198, 1.0
  %v201 = vadd.f32 %v199, 1.0
  %v202 = vmul.f32 %v194, %v200
  %v203 = vmul.f32 %v195, %v201
  %v204 = vpack.c.bf16 %v203, %v202
  %v205 = vld [vmem:[%s5] sm:$0xf]
  %v206 = vld [vmem:[%s5 + $0x4] sm:$0xf]
  %v207 = vld [vmem:[%s5 + $0x8] sm:$0xf]
  %v208 = vld [vmem:[%s5 + $0xc] sm:$0xf]
  %v209 = vld [vmem:[%s5 + $0x10] sm:$0xf]
  %v210 = vld [vmem:[%s5 + $0x14] sm:$0xf]
  %v211 = vld [vmem:[%s5 + $0x18] sm:$0xf]
  %v212 = vld [vmem:[%s5 + $0x1c] sm:$0xf]
  %v213 = vld [vmem:[%s5 + $0x20] sm:$0xf]
  %v214 = vld [vmem:[%s5 + $0x24] sm:$0xf]
  %v215 = vld [vmem:[%s5 + $0x28] sm:$0xf]
  %v216 = vld [vmem:[%s5 + $0x2c] sm:$0xf]
  %v217 = vld [vmem:[%s5 + $0x30] sm:$0xf]
  %v218 = vld [vmem:[%s5 + $0x34] sm:$0xf]
  %v219 = vld [vmem:[%s5 + $0x38] sm:$0xf]
  %v220 = vld [vmem:[%s5 + $0x3c] sm:$0xf]
  %v237 = vunpack.c.l.b16 %v205
  %v238 = vunpack.c.l.b16 %v206
  %v239 = vunpack.c.l.b16 %v207
  %v240 = vunpack.c.l.b16 %v208
  %v241 = vunpack.c.l.b16 %v209
  %v242 = vunpack.c.l.b16 %v210
  %v243 = vunpack.c.l.b16 %v211
  %v244 = vunpack.c.l.b16 %v212
  %v245 = vunpack.c.l.b16 %v213
  %v246 = vunpack.c.l.b16 %v214
  %v247 = vunpack.c.l.b16 %v215
  %v248 = vunpack.c.l.b16 %v216
  %v249 = vunpack.c.l.b16 %v217
  %v250 = vunpack.c.l.b16 %v218
  %v251 = vunpack.c.l.b16 %v219
  %v252 = vunpack.c.l.b16 %v220
  %v253 = vpack.c.b16 %v238, %v237
  %v254 = vpack.c.b16 %v240, %v239
  %v255 = vpack.c.b16 %v242, %v241
  %v256 = vpack.c.b16 %v244, %v243
  %v257 = vpack.c.b16 %v246, %v245
  %v258 = vpack.c.b16 %v248, %v247
  %v259 = vpack.c.b16 %v250, %v249
  %v260 = vpack.c.b16 %v252, %v251
  %269 = vmatprep.subr.bf16.mxu0 0
  %270 = vmatpush1.bf16.msra.mxu0 %v253
  %271 = vmatprep.subr.bf16.mxu0 0
  %272 = vmatpush1.bf16.msra.mxu0 %v254
  %273 = vmatprep.subr.bf16.mxu0 0
  %274 = vmatpush1.bf16.msra.mxu0 %v255
  %275 = vmatprep.subr.bf16.mxu0 0
  %276 = vmatpush1.bf16.msra.mxu0 %v256
  %277 = vmatprep.subr.bf16.mxu0 0
  %278 = vmatpush1.bf16.msra.mxu0 %v257
  %279 = vmatprep.subr.bf16.mxu0 0
  %280 = vmatpush1.bf16.msra.mxu0 %v258
  %281 = vmatprep.subr.bf16.mxu0 0
  %282 = vmatpush1.bf16.msra.mxu0 %v259
  %283 = vmatprep.subr.bf16.mxu0 0
  %284 = vmatpush1.bf16.msra.mxu0 %v260
  %285 = vmatprep.subr.bf16.mxu0 0
  %286 = vmatpush1.bf16.msra.mxu0 0
  %287 = vmatprep.subr.bf16.mxu0 0
  %288 = vmatpush1.bf16.msra.mxu0 0
  %289 = vmatprep.subr.bf16.mxu0 0
  %290 = vmatpush1.bf16.msra.mxu0 0
  %291 = vmatprep.subr.bf16.mxu0 0
  %292 = vmatpush1.bf16.msra.mxu0 0
  %293 = vmatprep.subr.bf16.mxu0 0
  %294 = vmatpush1.bf16.msra.mxu0 0
  %295 = vmatprep.subr.bf16.mxu0 0
  %296 = vmatpush1.bf16.msra.mxu0 0
  %297 = vmatprep.subr.bf16.mxu0 0
  %298 = vmatpush1.bf16.msra.mxu0 0
  %299 = vmatprep.subr.bf16.mxu0 0
  %300 = vmatpush1.bf16.msra.mxu0 0
  %301 = vmatprep.mubr.bf16.mxu0 0
  %302 = vmatmul.mubr.bf16.gmra.mrb[0].mxu0 %v204
  %v303 = vpop.f32.mrb[0].mxu0
  %v304 = vadd.f32 0.0, %v303
  %v305 = vpop.f32.mrb[0].mxu0
  %v306 = vpop.f32.mrb[0].mxu0
  %v307 = vadd.f32 0.0, %v306
  %v308 = vpop.f32.mrb[0].mxu0
  %309 = vdwg.mxu0
  // Predicated region
  $region34: #{feed_forward_block.1} parent=0 // pred_check
    %p310 = pneg %p27
  $region35: #{feed_forward_block.1} parent=0 // pred_check_branch
    %312 = sbr.rel (%p310) target = $region37
  $region36: #{feed_forward_block.1} parent=0 // pred_region
    %313 = vst [vmem:[#allocation3] sm:$0xff] %v304
    %314 = vst [vmem:[#allocation3 + $0x8] sm:$0xff] %v307
  $region37: #{feed_forward_block.1} parent=0 // pred_fallthru
    _
  %p315 = scmp.ne.s32.totalorder 0, 0
  // Predicated region
  $region38: #{feed_forward_block.1} parent=0 // pred_check
    %p316 = pneg %p315
  $region39: #{feed_forward_block.1} parent=0 // pred_check_branch
    %318 = sbr.rel (%p316) target = $region41
  $region40: #{feed_forward_block.1} parent=0 // pred_region
    %v319 = vld [vmem:[#allocation3] sm:$0xff]
    %v320 = vld [vmem:[#allocation3 + $0x8] sm:$0xff]
    %v321 = vadd.f32 %v319, %v304
    %v322 = vadd.f32 %v320, %v307
    %323 = vst [vmem:[#allocation3] sm:$0xff] %v321
    %324 = vst [vmem:[#allocation3 + $0x8] sm:$0xff] %v322
  $region41: #{feed_forward_block.1} parent=0 // pred_fallthru
    _
  // Predicated region
  $region42: #{feed_forward_block.1} parent=0 // pred_check
    %p325 = pneg %p27
  $region43: #{feed_forward_block.1} parent=0 // pred_check_branch
    %327 = sbr.rel (%p325) target = $region45
  $region44: #{feed_forward_block.1} parent=0 // pred_region
    %v328 = vld [vmem:[#allocation3] sm:$0xff]
    %v329 = vld [vmem:[#allocation3 + $0x8] sm:$0xff]
    %v330 = vld [vmem:[%s6] sm:$0x1]
    %v332 = vlaneseq
    %v333 = vshrl.u32 %v332, 7
    %v334 = vsub.s32 0, %v333
    %v335 = vrot.slane %v330, %v334
    %v337 = vadd.f32 %v328, %v335
    %v338 = vadd.f32 %v329, %v335
    %v339 = vld [vmem:[%s0] sm:$0xff]
    %v340 = vld [vmem:[%s0 + $0x8] sm:$0xff]
    %v341 = vadd.f32 %v339, %v337
    %v342 = vadd.f32 %v340, %v338
    %343 = vst [vmem:[%s7] sm:$0xff] %v341
    %344 = vst [vmem:[%s7 + $0x8] sm:$0xff] %v342
  $region45: #{feed_forward_block.1} parent=0 // pred_fallthru
    _
  // Predicated region
  $region46: #{feed_forward_block.1} parent=0 // pred_check
    _
  $region47: #{feed_forward_block.1} parent=0 // pred_check_branch
    %346 = sbr.rel (0) target = $region49
  $region48: #{feed_forward_block.1} parent=0 // pred_region
    _
  $region49: #{feed_forward_block.1} parent=0 // pred_fallthru
    _
  // Predicated region
  $region50: #{feed_forward_block.1} parent=0 // pred_check
    _
  $region51: #{feed_forward_block.1} parent=0 // pred_check_branch
    %348 = sbr.rel (0) target = $region53
  $region52: #{feed_forward_block.1} parent=0 // pred_region
    _
  $region53: #{feed_forward_block.1} parent=0 // pred_fallthru
    _

</llo_original>
